<compile_context>
chip_gen: v6e
topology: v6e:2x2x1
jax: 0.10.0
libtpu: 0.0.40
codegen_flags: <defaults>
</compile_context>

<pallas_src>
import jax
import jax.numpy as jnp
from jax.experimental import pallas as pl
from jax.experimental.pallas import tpu as pltpu


LANES = 128      # vreg lane width / MXU-friendly column multiple
SUBLANES = 8     # vreg sublane count / row multiple


def _round_up(x, m):
    return ((x + m - 1) // m) * m


def _matmul_kernel(p_ref, w_ref, o_ref):
    # p_ref: (BM, K)  bf16 im2col patch block (ones column for the bias inside)
    # w_ref: (K, Cp)  bf16 block-diagonal fused weight slab (bias rows folded in)
    # o_ref: (BM, Cp) f32 lane-dense output block
    o_ref[...] = jnp.dot(p_ref[...], w_ref[...],
                         preferred_element_type=jnp.float32)


def _multibox_matmul(patches, w_slab, *, num_row_blocks=1):
    """One MXU matmul covering every scale / head / batch element."""
    M, K = patches.shape
    K2, Cp = w_slab.shape
    assert K == K2
    assert M % num_row_blocks == 0
    bm = M // num_row_blocks
    assert bm % SUBLANES == 0 and K % LANES == 0 and Cp % LANES == 0

    return pl.pallas_call(
        _matmul_kernel,
        out_shape=jax.ShapeDtypeStruct((M, Cp), jnp.float32),
        grid=(num_row_blocks,),
        in_specs=[
            pl.BlockSpec((bm, K), lambda m: (m, 0)),   # row band of patches
            pl.BlockSpec((K, Cp), lambda m: (0, 0)),   # resident weight slab
        ],
        out_specs=pl.BlockSpec((bm, Cp), lambda m: (m, 0)),
        compiler_params=pltpu.CompilerParams(
            # num_row_blocks=1 -> single block (v5e/v6e); =2 lets v7x's two
            # TensorCores split the rows.  Measure before enabling on v7x.
            dimension_semantics=("parallel",)),
    )(patches, w_slab)


class MultiBoxLayerPallas:
    """JAX/Pallas port of MultiBoxLayer.

    Parameters are initialized deterministically in-script (synthetic config).
    A checkpoint's OIHW torch weights would be transposed (2, 3, 1, 0) to the
    HWIO layout used here before being fused into the block-diagonal slab.
    """

    def __init__(self, num_classes, num_anchor_list, num_feature_list, key,
                 num_row_blocks=1):
        self.num_classes = num_classes
        self.num_anchors = list(num_anchor_list)
        self.num_features = list(num_feature_list)
        self.num_row_blocks = num_row_blocks

        # Plain per-head f32 params (kept for the pure-JAX reference check).
        self.loc_w, self.loc_b, self.conf_w, self.conf_b = [], [], [], []
        self.loc_out, self.conf_out = [], []
        self.k_off, self.k_blk = [], []

        k_total = 0
        cp = LANES
        for i, cin in enumerate(self.num_features):
            a = self.num_anchors[i]
            key, k1, k2, k3, k4 = jax.random.split(key, 5)
            loc_out = a * 4
            conf_out = a * num_classes
            scale = 1.0 / jnp.sqrt(jnp.float32(cin * 9))
            lw = scale * jax.random.normal(k1, (3, 3, cin, loc_out), jnp.float32)
            lb = 0.01 * jax.random.normal(k2, (loc_out,), jnp.float32)
            cw = scale * jax.random.normal(k3, (3, 3, cin, conf_out), jnp.float32)
            cb = 0.01 * jax.random.normal(k4, (conf_out,), jnp.float32)
            self.loc_w.append(lw); self.loc_b.append(lb)
            self.conf_w.append(cw); self.conf_b.append(cb)
            self.loc_out.append(loc_out); self.conf_out.append(conf_out)

            # Per-scale contraction band: 9*Cin patch rows + 1 bias row,
            # zero-padded up to a multiple of 128 lanes.
            k_blk = _round_up(9 * cin + 1, LANES)
            cp = max(cp, _round_up(loc_out + conf_out, LANES))
            self.k_off.append(k_total)
            self.k_blk.append(k_blk)
            k_total += k_blk

        self.k_total = k_total
        self.cp = cp

        # Block-diagonal fused weight slab (all scales, loc||conf fused along
        # Cout, bias folded in as an extra contraction row).  bf16 MXU operand.
        w_slab = jnp.zeros((k_total, cp), jnp.float32)
        for i, cin in enumerate(self.num_features):
            cout = self.loc_out[i] + self.conf_out[i]
            wf = jnp.concatenate([self.loc_w[i], self.conf_w[i]], axis=-1)
            wf = wf.reshape(9 * cin, cout)                       # (kh,kw,cin) rows
            bf = jnp.concatenate([self.loc_b[i], self.conf_b[i]])[None, :]
            blk = jnp.concatenate([wf, bf], axis=0)              # (9*cin+1, cout)
            w_slab = w_slab.at[self.k_off[i]:self.k_off[i] + 9 * cin + 1,
                               :cout].set(blk)
        self.w_slab = w_slab.astype(jnp.bfloat16)

        self._forward = jax.jit(self._build_forward())

    def _build_forward(self):
        num_classes = self.num_classes
        k_off = self.k_off
        k_total, cp = self.k_total, self.cp
        loc_out, conf_out = self.loc_out, self.conf_out
        num_row_blocks = self.num_row_blocks

        def fwd(features, w_slab):
            # --- wrapper-side im2col (plain XLA, fused under jit) ----------
            row_blocks, row_off = [], []
            rows = 0
            for i, x in enumerate(features):
                N, Cin, H, W = x.shape
                x_nhwc = jnp.transpose(x, (0, 2, 3, 1))              # NCHW->NHWC
                xpad = jnp.pad(x_nhwc, ((0, 0), (1, 1), (1, 1), (0, 0)))
                # (kh, kw, cin) ordering matches the (3,3,Cin,Cout)->(9*Cin,Cout)
                # weight reshape.
                cols = [xpad[:, kh:kh + H, kw:kw + W, :]
                        for kh in range(3) for kw in range(3)]
                p = jnp.concatenate(cols, axis=-1).reshape(N * H * W, 9 * Cin)
                ones = jnp.ones((N * H * W, 1), p.dtype)             # bias column
                p = jnp.concatenate([p, ones], axis=-1)
                # Place this scale's patches in its block-diagonal column band.
                p = jnp.pad(p, ((0, 0),
                                (k_off[i], k_total - k_off[i] - (9 * Cin + 1))))
                row_off.append(rows)
                rows += N * H * W
                row_blocks.append(p)

            patches = jnp.concatenate(row_blocks, axis=0)
            m_pad = _round_up(rows, SUBLANES * num_row_blocks) - rows
            if m_pad:
                patches = jnp.pad(patches, ((0, m_pad), (0, 0)))
            patches = patches.astype(jnp.bfloat16)

            # --- single Pallas launch: all scales, heads, batch elements ---
            y = _multibox_matmul(patches, w_slab,
                                 num_row_blocks=num_row_blocks)      # (Mp, Cp) f32

            # --- epilogue: slice per-scale loc/conf columns, reshape, concat
            y_locs, y_confs = [], []
            for i, x in enumerate(features):
                N, Cin, H, W = x.shape
                yi = y[row_off[i]:row_off[i] + N * H * W].reshape(N, H * W, cp)
                lo, co = loc_out[i], conf_out[i]
                y_locs.append(yi[:, :, :lo].reshape(N, -1, 4))
                y_confs.append(yi[:, :, lo:lo + co].reshape(N, -1, num_classes))
            return (jnp.concatenate(y_locs, axis=1),
                    jnp.concatenate(y_confs, axis=1))

        return fwd

    def __call__(self, features_nchw):
        return self._forward(tuple(features_nchw), self.w_slab)


def _ref_conv3x3_same(x_nhwc, w_hwio, bias):
    """Pure-JAX f32 reference (same semantics as torch Conv2d 3x3 / pad=1)."""
    out = jax.lax.conv_general_dilated(
        x_nhwc, w_hwio, window_strides=(1, 1), padding="SAME",
        dimension_numbers=("NHWC", "HWIO", "NHWC"))
    return out + bias[None, None, None, :]


if __name__ == "__main__":
    key = jax.random.PRNGKey(0)

    # Synthetic config: 2 feature maps, as the module's __init__ implies.
    num_classes = 4
    num_anchor_list = [2, 3]
    num_feature_list = [4, 8]

    key, kf1, kf2, kparams = jax.random.split(key, 4)
    # Inputs built in NCHW to mirror the PyTorch module's convention.
    feat0 = jax.random.normal(kf1, (2, 4, 16, 16), jnp.float32)
    feat1 = jax.random.normal(kf2, (2, 8, 8, 8), jnp.float32)
    features = [feat0, feat1]

    layer = MultiBoxLayerPallas(num_classes, num_anchor_list,
                                num_feature_list, kparams,
                                num_row_blocks=1)   # set 2 on v7x after xprof

    loc_preds, conf_preds = layer(features)
    loc_preds = jax.block_until_ready(loc_preds)
    conf_preds = jax.block_until_ready(conf_preds)

    # Expected shapes: sum_i H_i*W_i*A_i = 16*16*2 + 8*8*3 = 512 + 192 = 704
    assert loc_preds.shape == (2, 704, 4), loc_preds.shape
    assert conf_preds.shape == (2, 704, num_classes), conf_preds.shape

    # Cross-check against a pure-JAX f32 reference.  The kernel uses bf16 MXU
    # operands (incl. the folded bias) with f32 accumulation, so tolerance is
    # relaxed vs. pure f32.
    ref_locs, ref_confs = [], []
    for i, x in enumerate(features):
        x_nhwc = jnp.transpose(x, (0, 2, 3, 1))
        N = x_nhwc.shape[0]
        rl = _ref_conv3x3_same(x_nhwc, layer.loc_w[i], layer.loc_b[i])
        rc = _ref_conv3x3_same(x_nhwc, layer.conf_w[i], layer.conf_b[i])
        ref_locs.append(rl.reshape(N, -1, 4))
        ref_confs.append(rc.reshape(N, -1, num_classes))
    ref_loc = jnp.concatenate(ref_locs, axis=1)
    ref_conf = jnp.concatenate(ref_confs, axis=1)

    assert jnp.allclose(loc_preds, ref_loc, atol=5e-2, rtol=5e-2)
    assert jnp.allclose(conf_preds, ref_conf, atol=5e-2, rtol=5e-2)

    print("KERNEL_OK")
</pallas_src>

<mosaic_0001>
module attributes {stable_mosaic.version = 11 : i64} {
  func.func @_matmul_kernel(%arg0: i32, %arg1: memref<640x256xbf16, #tpu.memory_space<vmem>>, %arg2: memref<256x128xbf16, #tpu.memory_space<vmem>>, %arg3: memref<640x128xf32, #tpu.memory_space<vmem>>) attributes {dimension_semantics = [#tpu.dimension_semantics<parallel>], iteration_bounds = array<i64: 1>, scalar_prefetch = 0 : i64, scratch_operands = 0 : i64, tpu.core_type = #tpu.core_type<tc>, window_params = [{transform_indices = @transform_0, window_bounds = array<i64: 640, 256>}, {pipeline_mode = #tpu.pipeline_mode<synchronous>, transform_indices = @transform_1, window_bounds = array<i64: 256, 128>}, {transform_indices = @transform_2, window_bounds = array<i64: 640, 128>}]} {
    %c0 = arith.constant 0 : index
    %c0_0 = arith.constant 0 : index
    %0 = vector.load %arg1[%c0, %c0_0] : memref<640x256xbf16, #tpu.memory_space<vmem>>, vector<640x256xbf16>
    %c0_1 = arith.constant 0 : index
    %c0_2 = arith.constant 0 : index
    %1 = vector.load %arg2[%c0_1, %c0_2] : memref<256x128xbf16, #tpu.memory_space<vmem>>, vector<256x128xbf16>
    %cst = arith.constant dense<0.000000e+00> : vector<640x128xf32>
    %2 = tpu.matmul %0, %1, %cst {dimension_numbers = #tpu.dot_dimension_numbers<[1], [0], [0], [1], [0, 0, 1, 1], [], []>} : vector<640x256xbf16>, vector<256x128xbf16>, vector<640x128xf32> -> vector<640x128xf32>
    %c0_3 = arith.constant 0 : index
    %c0_4 = arith.constant 0 : index
    %3 = vector.load %arg3[%c0_3, %c0_4] : memref<640x128xf32, #tpu.memory_space<vmem>>, vector<640x128xf32>
    tpu.vector_store %arg3[%c0_3, %c0_4], %2 {strides = array<i32>} : memref<640x128xf32, #tpu.memory_space<vmem>>, vector<640x128xf32>,
    return
  }
  func.func @transform_0(%arg0: i32) -> (i32, i32) {
    %c0_i32 = arith.constant 0 : i32
    %c0_i32_0 = arith.constant 0 : i32
    return %arg0, %c0_i32 : i32, i32
  }
  func.func @transform_1(%arg0: i32) -> (i32, i32) {
    %c0_i32 = arith.constant 0 : i32
    %c0_i32_0 = arith.constant 0 : i32
    %c0_i32_1 = arith.constant 0 : i32
    return %c0_i32, %c0_i32_0 : i32, i32
  }
  func.func @transform_2(%arg0: i32) -> (i32, i32) {
    %c0_i32 = arith.constant 0 : i32
    %c0_i32_0 = arith.constant 0 : i32
    return %arg0, %c0_i32 : i32, i32
  }
}

</mosaic_0001>

<llo_original>
// kernel: fwd.1
$region0: #{fwd.1}
  #allocation0 [shape = 'u32[]', space=smem, size = 0x4, offset = 0x4, fixed_abs, tag = 'smem constant byte address 0x4 - core index']
  #allocation1 [shape = 'u32[144,128]{1,0:T(1,128)}', space=vmem, size = 0x12000, scoped, tag = 'internal scratch']
  %s0 = inlined_call_operand.vmem [shape: bf16[640,256], index: 0, kind: input, shape index: {}]
  %s1 = inlined_call_operand.vmem [shape: bf16[256,128], index: 1, kind: input, shape index: {}]
  %s2 = inlined_call_operand.vmem [shape: f32[640,128], index: 2, kind: output, shape index: {}]
  %s3 = sld [smem:[#allocation0]]
  $region18: #{fwd.1} parent=0
    _
  %s5 = ssub.s32 1, %s3
  %s6 = scalar_select 0, %s5, %s3
  // Predicated region
  $region2: #{fwd.1} parent=0 // pred_check
    _
  $region3: #{fwd.1} parent=0 // pred_check_branch
    %8 = sbr.rel (0) target = $region5
  $region4: #{fwd.1} parent=0 // pred_region
    _
  $region5: #{fwd.1} parent=0 // pred_fallthru
    _
  // Predicated region
  $region6: #{fwd.1} parent=0 // pred_check
    _
  $region7: #{fwd.1} parent=0 // pred_check_branch
    %10 = sbr.rel (0) target = $region9
  $region8: #{fwd.1} parent=0 // pred_region
    _
  $region9: #{fwd.1} parent=0 // pred_fallthru
    _
  %v12 = vld [vmem:[%s0] sm:$0xff]
  %v13 = vld [vmem:[%s0 + $0x8] sm:$0xff]
  %v14 = vld [vmem:[%s0 + $0x10] sm:$0xff]
  %v15 = vld [vmem:[%s0 + $0x18] sm:$0xff]
  %v16 = vld [vmem:[%s0 + $0x20] sm:$0xff]
  %v17 = vld [vmem:[%s0 + $0x28] sm:$0xff]
  %v18 = vld [vmem:[%s0 + $0x30] sm:$0xff]
  %v19 = vld [vmem:[%s0 + $0x38] sm:$0xff]
  %v20 = vld [vmem:[%s0 + $0x40] sm:$0xff]
  %v21 = vld [vmem:[%s0 + $0x48] sm:$0xff]
  %v22 = vld [vmem:[%s0 + $0x50] sm:$0xff]
  %v23 = vld [vmem:[%s0 + $0x58] sm:$0xff]
  %v24 = vld [vmem:[%s0 + $0x60] sm:$0xff]
  %v25 = vld [vmem:[%s0 + $0x68] sm:$0xff]
  %v26 = vld [vmem:[%s0 + $0x70] sm:$0xff]
  %v27 = vld [vmem:[%s0 + $0x78] sm:$0xff]
  %v28 = vld [vmem:[%s0 + $0x80] sm:$0xff]
  %v29 = vld [vmem:[%s0 + $0x88] sm:$0xff]
  %v30 = vld [vmem:[%s0 + $0x90] sm:$0xff]
  %v31 = vld [vmem:[%s0 + $0x98] sm:$0xff]
  %v32 = vld [vmem:[%s0 + $0xa0] sm:$0xff]
  %v33 = vld [vmem:[%s0 + $0xa8] sm:$0xff]
  %v34 = vld [vmem:[%s0 + $0xb0] sm:$0xff]
  %v35 = vld [vmem:[%s0 + $0xb8] sm:$0xff]
  %v36 = vld [vmem:[%s0 + $0xc0] sm:$0xff]
  %v37 = vld [vmem:[%s0 + $0xc8] sm:$0xff]
  %v38 = vld [vmem:[%s0 + $0xd0] sm:$0xff]
  %v39 = vld [vmem:[%s0 + $0xd8] sm:$0xff]
  %v40 = vld [vmem:[%s0 + $0xe0] sm:$0xff]
  %v41 = vld [vmem:[%s0 + $0xe8] sm:$0xff]
  %v42 = vld [vmem:[%s0 + $0xf0] sm:$0xff]
  %v43 = vld [vmem:[%s0 + $0xf8] sm:$0xff]
  %v44 = vld [vmem:[%s0 + $0x100] sm:$0xff]
  %v45 = vld [vmem:[%s0 + $0x108] sm:$0xff]
  %v46 = vld [vmem:[%s0 + $0x110] sm:$0xff]
  %v47 = vld [vmem:[%s0 + $0x118] sm:$0xff]
  %v48 = vld [vmem:[%s0 + $0x120] sm:$0xff]
  %v49 = vld [vmem:[%s0 + $0x128] sm:$0xff]
  %v50 = vld [vmem:[%s0 + $0x130] sm:$0xff]
  %v51 = vld [vmem:[%s0 + $0x138] sm:$0xff]
  %v52 = vld [vmem:[%s0 + $0x140] sm:$0xff]
  %v53 = vld [vmem:[%s0 + $0x148] sm:$0xff]
  %v54 = vld [vmem:[%s0 + $0x150] sm:$0xff]
  %v55 = vld [vmem:[%s0 + $0x158] sm:$0xff]
  %v56 = vld [vmem:[%s0 + $0x160] sm:$0xff]
  %v57 = vld [vmem:[%s0 + $0x168] sm:$0xff]
  %v58 = vld [vmem:[%s0 + $0x170] sm:$0xff]
  %v59 = vld [vmem:[%s0 + $0x178] sm:$0xff]
  %v60 = vld [vmem:[%s0 + $0x180] sm:$0xff]
  %v61 = vld [vmem:[%s0 + $0x188] sm:$0xff]
  %v62 = vld [vmem:[%s0 + $0x190] sm:$0xff]
  %v63 = vld [vmem:[%s0 + $0x198] sm:$0xff]
  %v64 = vld [vmem:[%s0 + $0x1a0] sm:$0xff]
  %v65 = vld [vmem:[%s0 + $0x1a8] sm:$0xff]
  %v66 = vld [vmem:[%s0 + $0x1b0] sm:$0xff]
  %v67 = vld [vmem:[%s0 + $0x1b8] sm:$0xff]
  %v68 = vld [vmem:[%s0 + $0x1c0] sm:$0xff]
  %v69 = vld [vmem:[%s0 + $0x1c8] sm:$0xff]
  %v70 = vld [vmem:[%s0 + $0x1d0] sm:$0xff]
  %v71 = vld [vmem:[%s0 + $0x1d8] sm:$0xff]
  %v72 = vld [vmem:[%s0 + $0x1e0] sm:$0xff]
  %v73 = vld [vmem:[%s0 + $0x1e8] sm:$0xff]
  %v74 = vld [vmem:[%s0 + $0x1f0] sm:$0xff]
  %v75 = vld [vmem:[%s0 + $0x1f8] sm:$0xff]
  %v76 = vld [vmem:[%s0 + $0x200] sm:$0xff]
  %v77 = vld [vmem:[%s0 + $0x208] sm:$0xff]
  %v78 = vld [vmem:[%s0 + $0x210] sm:$0xff]
  %v79 = vld [vmem:[%s0 + $0x218] sm:$0xff]
  %v80 = vld [vmem:[%s0 + $0x220] sm:$0xff]
  %v81 = vld [vmem:[%s0 + $0x228] sm:$0xff]
  %v82 = vld [vmem:[%s0 + $0x230] sm:$0xff]
  %v83 = vld [vmem:[%s0 + $0x238] sm:$0xff]
  %v84 = vld [vmem:[%s0 + $0x240] sm:$0xff]
  %v85 = vld [vmem:[%s0 + $0x248] sm:$0xff]
  %v86 = vld [vmem:[%s0 + $0x250] sm:$0xff]
  %v87 = vld [vmem:[%s0 + $0x258] sm:$0xff]
  %v88 = vld [vmem:[%s0 + $0x260] sm:$0xff]
  %v89 = vld [vmem:[%s0 + $0x268] sm:$0xff]
  %v90 = vld [vmem:[%s0 + $0x270] sm:$0xff]
  %v91 = vld [vmem:[%s0 + $0x278] sm:$0xff]
  %v92 = vld [vmem:[%s1] sm:$0xf]
  %v93 = vld [vmem:[%s1 + $0x4] sm:$0xf]
  %v94 = vld [vmem:[%s1 + $0x8] sm:$0xf]
  %v95 = vld [vmem:[%s1 + $0xc] sm:$0xf]
  %v96 = vld [vmem:[%s1 + $0x10] sm:$0xf]
  %v97 = vld [vmem:[%s1 + $0x14] sm:$0xf]
  %v98 = vld [vmem:[%s1 + $0x18] sm:$0xf]
  %v99 = vld [vmem:[%s1 + $0x1c] sm:$0xf]
  %v100 = vld [vmem:[%s1 + $0x20] sm:$0xf]
  %v101 = vld [vmem:[%s1 + $0x24] sm:$0xf]
  %v102 = vld [vmem:[%s1 + $0x28] sm:$0xf]
  %v103 = vld [vmem:[%s1 + $0x2c] sm:$0xf]
  %v104 = vld [vmem:[%s1 + $0x30] sm:$0xf]
  %v105 = vld [vmem:[%s1 + $0x34] sm:$0xf]
  %v106 = vld [vmem:[%s1 + $0x38] sm:$0xf]
  %v107 = vld [vmem:[%s1 + $0x3c] sm:$0xf]
  %v108 = vld [vmem:[%s1 + $0x40] sm:$0xf]
  %v109 = vld [vmem:[%s1 + $0x44] sm:$0xf]
  %v110 = vld [vmem:[%s1 + $0x48] sm:$0xf]
  %v111 = vld [vmem:[%s1 + $0x4c] sm:$0xf]
  %v112 = vld [vmem:[%s1 + $0x50] sm:$0xf]
  %v113 = vld [vmem:[%s1 + $0x54] sm:$0xf]
  %v114 = vld [vmem:[%s1 + $0x58] sm:$0xf]
  %v115 = vld [vmem:[%s1 + $0x5c] sm:$0xf]
  %v116 = vld [vmem:[%s1 + $0x60] sm:$0xf]
  %v117 = vld [vmem:[%s1 + $0x64] sm:$0xf]
  %v118 = vld [vmem:[%s1 + $0x68] sm:$0xf]
  %v119 = vld [vmem:[%s1 + $0x6c] sm:$0xf]
  %v120 = vld [vmem:[%s1 + $0x70] sm:$0xf]
  %v121 = vld [vmem:[%s1 + $0x74] sm:$0xf]
  %v122 = vld [vmem:[%s1 + $0x78] sm:$0xf]
  %v123 = vld [vmem:[%s1 + $0x7c] sm:$0xf]
  %v204 = vunpack.c.l.b16 %v12
  %v205 = vunpack.c.h.b16 %v12
  %v206 = vunpack.c.l.b16 %v13
  %v207 = vunpack.c.h.b16 %v13
  %v208 = vunpack.c.l.b16 %v14
  %v209 = vunpack.c.h.b16 %v14
  %v210 = vunpack.c.l.b16 %v15
  %v211 = vunpack.c.h.b16 %v15
  %v212 = vunpack.c.l.b16 %v16
  %v213 = vunpack.c.h.b16 %v16
  %v214 = vunpack.c.l.b16 %v17
  %v215 = vunpack.c.h.b16 %v17
  %v216 = vunpack.c.l.b16 %v18
  %v217 = vunpack.c.h.b16 %v18
  %v218 = vunpack.c.l.b16 %v19
  %v219 = vunpack.c.h.b16 %v19
  %v220 = vunpack.c.l.b16 %v20
  %v221 = vunpack.c.h.b16 %v20
  %v222 = vunpack.c.l.b16 %v21
  %v223 = vunpack.c.h.b16 %v21
  %v224 = vunpack.c.l.b16 %v22
  %v225 = vunpack.c.h.b16 %v22
  %v226 = vunpack.c.l.b16 %v23
  %v227 = vunpack.c.h.b16 %v23
  %v228 = vunpack.c.l.b16 %v24
  %v229 = vunpack.c.h.b16 %v24
  %v230 = vunpack.c.l.b16 %v25
  %v231 = vunpack.c.h.b16 %v25
  %v232 = vunpack.c.l.b16 %v26
  %v233 = vunpack.c.h.b16 %v26
  %v234 = vunpack.c.l.b16 %v27
  %v235 = vunpack.c.h.b16 %v27
  %v236 = vunpack.c.l.b16 %v28
  %v237 = vunpack.c.h.b16 %v28
  %v238 = vunpack.c.l.b16 %v29
  %v239 = vunpack.c.h.b16 %v29
  %v240 = vunpack.c.l.b16 %v30
  %v241 = vunpack.c.h.b16 %v30
  %v242 = vunpack.c.l.b16 %v31
  %v243 = vunpack.c.h.b16 %v31
  %v244 = vunpack.c.l.b16 %v32
  %v245 = vunpack.c.h.b16 %v32
  %v246 = vunpack.c.l.b16 %v33
  %v247 = vunpack.c.h.b16 %v33
  %v248 = vunpack.c.l.b16 %v34
  %v249 = vunpack.c.h.b16 %v34
  %v250 = vunpack.c.l.b16 %v35
  %v251 = vunpack.c.h.b16 %v35
  %v252 = vunpack.c.l.b16 %v36
  %v253 = vunpack.c.h.b16 %v36
  %v254 = vunpack.c.l.b16 %v37
  %v255 = vunpack.c.h.b16 %v37
  %v256 = vunpack.c.l.b16 %v38
  %v257 = vunpack.c.h.b16 %v38
  %v258 = vunpack.c.l.b16 %v39
  %v259 = vunpack.c.h.b16 %v39
  %v260 = vunpack.c.l.b16 %v40
  %v261 = vunpack.c.h.b16 %v40
  %v262 = vunpack.c.l.b16 %v41
  %v263 = vunpack.c.h.b16 %v41
  %v264 = vunpack.c.l.b16 %v42
  %v265 = vunpack.c.h.b16 %v42
  %v266 = vunpack.c.l.b16 %v43
  %v267 = vunpack.c.h.b16 %v43
  %v268 = vunpack.c.l.b16 %v44
  %v269 = vunpack.c.h.b16 %v44
  %v270 = vunpack.c.l.b16 %v45
  %v271 = vunpack.c.h.b16 %v45
  %v272 = vunpack.c.l.b16 %v46
  %v273 = vunpack.c.h.b16 %v46
  %v274 = vunpack.c.l.b16 %v47
  %v275 = vunpack.c.h.b16 %v47
  %v276 = vunpack.c.l.b16 %v48
  %v277 = vunpack.c.h.b16 %v48
  %v278 = vunpack.c.l.b16 %v49
  %v279 = vunpack.c.h.b16 %v49
  %v280 = vunpack.c.l.b16 %v50
  %v281 = vunpack.c.h.b16 %v50
  %v282 = vunpack.c.l.b16 %v51
  %v283 = vunpack.c.h.b16 %v51
  %v284 = vunpack.c.l.b16 %v52
  %v285 = vunpack.c.h.b16 %v52
  %v286 = vunpack.c.l.b16 %v53
  %v287 = vunpack.c.h.b16 %v53
  %v288 = vunpack.c.l.b16 %v54
  %v289 = vunpack.c.h.b16 %v54
  %v290 = vunpack.c.l.b16 %v55
  %v291 = vunpack.c.h.b16 %v55
  %v292 = vunpack.c.l.b16 %v56
  %v293 = vunpack.c.h.b16 %v56
  %v294 = vunpack.c.l.b16 %v57
  %v295 = vunpack.c.h.b16 %v57
  %v296 = vunpack.c.l.b16 %v58
  %v297 = vunpack.c.h.b16 %v58
  %v298 = vunpack.c.l.b16 %v59
  %v299 = vunpack.c.h.b16 %v59
  %v300 = vunpack.c.l.b16 %v60
  %v301 = vunpack.c.h.b16 %v60
  %v302 = vunpack.c.l.b16 %v61
  %v303 = vunpack.c.h.b16 %v61
  %v304 = vunpack.c.l.b16 %v62
  %v305 = vunpack.c.h.b16 %v62
  %v306 = vunpack.c.l.b16 %v63
  %v307 = vunpack.c.h.b16 %v63
  %v308 = vunpack.c.l.b16 %v64
  %v309 = vunpack.c.h.b16 %v64
  %v310 = vunpack.c.l.b16 %v65
  %v311 = vunpack.c.h.b16 %v65
  %v312 = vunpack.c.l.b16 %v66
  %v313 = vunpack.c.h.b16 %v66
  %v314 = vunpack.c.l.b16 %v67
  %v315 = vunpack.c.h.b16 %v67
  %v316 = vunpack.c.l.b16 %v68
  %v317 = vunpack.c.h.b16 %v68
  %v318 = vunpack.c.l.b16 %v69
  %v319 = vunpack.c.h.b16 %v69
  %v320 = vunpack.c.l.b16 %v70
  %v321 = vunpack.c.h.b16 %v70
  %v322 = vunpack.c.l.b16 %v71
  %v323 = vunpack.c.h.b16 %v71
  %v324 = vunpack.c.l.b16 %v72
  %v325 = vunpack.c.h.b16 %v72
  %v326 = vunpack.c.l.b16 %v73
  %v327 = vunpack.c.h.b16 %v73
  %v328 = vunpack.c.l.b16 %v74
  %v329 = vunpack.c.h.b16 %v74
  %v330 = vunpack.c.l.b16 %v75
  %v331 = vunpack.c.h.b16 %v75
  %v332 = vunpack.c.l.b16 %v76
  %v333 = vunpack.c.h.b16 %v76
  %v334 = vunpack.c.l.b16 %v77
  %v335 = vunpack.c.h.b16 %v77
  %v336 = vunpack.c.l.b16 %v78
  %v337 = vunpack.c.h.b16 %v78
  %v338 = vunpack.c.l.b16 %v79
  %v339 = vunpack.c.h.b16 %v79
  %v340 = vunpack.c.l.b16 %v80
  %v341 = vunpack.c.h.b16 %v80
  %v342 = vunpack.c.l.b16 %v81
  %v343 = vunpack.c.h.b16 %v81
  %v344 = vunpack.c.l.b16 %v82
  %v345 = vunpack.c.h.b16 %v82
  %v346 = vunpack.c.l.b16 %v83
  %v347 = vunpack.c.h.b16 %v83
  %v348 = vunpack.c.l.b16 %v84
  %v349 = vunpack.c.h.b16 %v84
  %v350 = vunpack.c.l.b16 %v85
  %v351 = vunpack.c.h.b16 %v85
  %v352 = vunpack.c.l.b16 %v86
  %v353 = vunpack.c.h.b16 %v86
  %v354 = vunpack.c.l.b16 %v87
  %v355 = vunpack.c.h.b16 %v87
  %v356 = vunpack.c.l.b16 %v88
  %v357 = vunpack.c.h.b16 %v88
  %v358 = vunpack.c.l.b16 %v89
  %v359 = vunpack.c.h.b16 %v89
  %v360 = vunpack.c.l.b16 %v90
  %v361 = vunpack.c.h.b16 %v90
  %v362 = vunpack.c.l.b16 %v91
  %v363 = vunpack.c.h.b16 %v91
  %v364 = vpack.c.b16 %v206, %v204
  %v365 = vpack.c.b16 %v207, %v205
  %v366 = vpack.c.b16 %v210, %v208
  %v367 = vpack.c.b16 %v211, %v209
  %v368 = vpack.c.b16 %v214, %v212
  %v369 = vpack.c.b16 %v215, %v213
  %v370 = vpack.c.b16 %v218, %v216
  %v371 = vpack.c.b16 %v219, %v217
  %v372 = vpack.c.b16 %v222, %v220
  %v373 = vpack.c.b16 %v223, %v221
  %v374 = vpack.c.b16 %v226, %v224
  %v375 = vpack.c.b16 %v227, %v225
  %v376 = vpack.c.b16 %v230, %v228
  %v377 = vpack.c.b16 %v231, %v229
  %v378 = vpack.c.b16 %v234, %v232
  %v379 = vpack.c.b16 %v235, %v233
  %v380 = vpack.c.b16 %v238, %v236
  %v381 = vpack.c.b16 %v239, %v237
  %v382 = vpack.c.b16 %v242, %v240
  %v383 = vpack.c.b16 %v243, %v241
  %v384 = vpack.c.b16 %v246, %v244
  %v385 = vpack.c.b16 %v247, %v245
  %v386 = vpack.c.b16 %v250, %v248
  %v387 = vpack.c.b16 %v251, %v249
  %v388 = vpack.c.b16 %v254, %v252
  %v389 = vpack.c.b16 %v255, %v253
  %v390 = vpack.c.b16 %v258, %v256
  %v391 = vpack.c.b16 %v259, %v257
  %v392 = vpack.c.b16 %v262, %v260
  %v393 = vpack.c.b16 %v263, %v261
  %v394 = vpack.c.b16 %v266, %v264
  %v395 = vpack.c.b16 %v267, %v265
  %v396 = vpack.c.b16 %v270, %v268
  %v397 = vpack.c.b16 %v271, %v269
  %v398 = vpack.c.b16 %v274, %v272
  %v399 = vpack.c.b16 %v275, %v273
  %v400 = vpack.c.b16 %v278, %v276
  %v401 = vpack.c.b16 %v279, %v277
  %v402 = vpack.c.b16 %v282, %v280
  %v403 = vpack.c.b16 %v283, %v281
  %v404 = vpack.c.b16 %v286, %v284
  %v405 = vpack.c.b16 %v287, %v285
  %v406 = vpack.c.b16 %v290, %v288
  %v407 = vpack.c.b16 %v291, %v289
  %v408 = vpack.c.b16 %v294, %v292
  %v409 = vpack.c.b16 %v295, %v293
  %v410 = vpack.c.b16 %v298, %v296
  %v411 = vpack.c.b16 %v299, %v297
  %v412 = vpack.c.b16 %v302, %v300
  %v413 = vpack.c.b16 %v303, %v301
  %v414 = vpack.c.b16 %v306, %v304
  %v415 = vpack.c.b16 %v307, %v305
  %v416 = vpack.c.b16 %v310, %v308
  %v417 = vpack.c.b16 %v311, %v309
  %v418 = vpack.c.b16 %v314, %v312
  %v419 = vpack.c.b16 %v315, %v313
  %v420 = vpack.c.b16 %v318, %v316
  %v421 = vpack.c.b16 %v319, %v317
  %v422 = vpack.c.b16 %v322, %v320
  %v423 = vpack.c.b16 %v323, %v321
  %v424 = vpack.c.b16 %v326, %v324
  %v425 = vpack.c.b16 %v327, %v325
  %v426 = vpack.c.b16 %v330, %v328
  %v427 = vpack.c.b16 %v331, %v329
  %v428 = vpack.c.b16 %v334, %v332
  %v429 = vpack.c.b16 %v335, %v333
  %v430 = vpack.c.b16 %v338, %v336
  %v431 = vpack.c.b16 %v339, %v337
  %v432 = vpack.c.b16 %v342, %v340
  %v433 = vpack.c.b16 %v343, %v341
  %v434 = vpack.c.b16 %v346, %v344
  %v435 = vpack.c.b16 %v347, %v345
  %v436 = vpack.c.b16 %v350, %v348
  %v437 = vpack.c.b16 %v351, %v349
  %v438 = vpack.c.b16 %v354, %v352
  %v439 = vpack.c.b16 %v355, %v353
  %v440 = vpack.c.b16 %v358, %v356
  %v441 = vpack.c.b16 %v359, %v357
  %v442 = vpack.c.b16 %v362, %v360
  %v443 = vpack.c.b16 %v363, %v361
  %v556 = vunpack.c.l.b16 %v92
  %v557 = vunpack.c.l.b16 %v93
  %v558 = vunpack.c.l.b16 %v94
  %v559 = vunpack.c.l.b16 %v95
  %v560 = vunpack.c.l.b16 %v96
  %v561 = vunpack.c.l.b16 %v97
  %v562 = vunpack.c.l.b16 %v98
  %v563 = vunpack.c.l.b16 %v99
  %v564 = vunpack.c.l.b16 %v100
  %v565 = vunpack.c.l.b16 %v101
  %v566 = vunpack.c.l.b16 %v102
  %v567 = vunpack.c.l.b16 %v103
  %v568 = vunpack.c.l.b16 %v104
  %v569 = vunpack.c.l.b16 %v105
  %v570 = vunpack.c.l.b16 %v106
  %v571 = vunpack.c.l.b16 %v107
  %v572 = vunpack.c.l.b16 %v108
  %v573 = vunpack.c.l.b16 %v109
  %v574 = vunpack.c.l.b16 %v110
  %v575 = vunpack.c.l.b16 %v111
  %v576 = vunpack.c.l.b16 %v112
  %v577 = vunpack.c.l.b16 %v113
  %v578 = vunpack.c.l.b16 %v114
  %v579 = vunpack.c.l.b16 %v115
  %v580 = vunpack.c.l.b16 %v116
  %v581 = vunpack.c.l.b16 %v117
  %v582 = vunpack.c.l.b16 %v118
  %v583 = vunpack.c.l.b16 %v119
  %v584 = vunpack.c.l.b16 %v120
  %v585 = vunpack.c.l.b16 %v121
  %v586 = vunpack.c.l.b16 %v122
  %v587 = vunpack.c.l.b16 %v123
  %v588 = vpack.c.b16 %v557, %v556
  %v589 = vpack.c.b16 %v559, %v558
  %v590 = vpack.c.b16 %v561, %v560
  %v591 = vpack.c.b16 %v563, %v562
  %v592 = vpack.c.b16 %v565, %v564
  %v593 = vpack.c.b16 %v567, %v566
  %v594 = vpack.c.b16 %v569, %v568
  %v595 = vpack.c.b16 %v571, %v570
  %v596 = vpack.c.b16 %v573, %v572
  %v597 = vpack.c.b16 %v575, %v574
  %v598 = vpack.c.b16 %v577, %v576
  %v599 = vpack.c.b16 %v579, %v578
  %v600 = vpack.c.b16 %v581, %v580
  %v601 = vpack.c.b16 %v583, %v582
  %v602 = vpack.c.b16 %v585, %v584
  %v603 = vpack.c.b16 %v587, %v586
  %620 = vmatprep.subr.bf16.mxu0 0
  %621 = vmatpush1.bf16.msra.mxu0 %v595
  %622 = vmatprep.subr.bf16.mxu0 0
  %623 = vmatpush1.bf16.msra.mxu0 %v594
  %624 = vmatprep.subr.bf16.mxu0 0
  %625 = vmatpush1.bf16.msra.mxu0 %v593
  %626 = vmatprep.subr.bf16.mxu0 0
  %627 = vmatpush1.bf16.msra.mxu0 %v592
  %628 = vmatprep.subr.bf16.mxu0 0
  %629 = vmatpush1.bf16.msra.mxu0 %v591
  %630 = vmatprep.subr.bf16.mxu0 0
  %631 = vmatpush1.bf16.msra.mxu0 %v590
  %632 = vmatprep.subr.bf16.mxu0 0
  %633 = vmatpush1.bf16.msra.mxu0 %v589
  %634 = vmatprep.subr.bf16.mxu0 0
  %635 = vmatpush1.bf16.msra.mxu0 %v588
  %636 = vmatprep.subr.bf16.mxu0 0
  %637 = vmatpush2.bf16.msra.mxu0 %v603
  %638 = vmatprep.subr.bf16.mxu0 0
  %639 = vmatpush2.bf16.msra.mxu0 %v602
  %640 = vmatprep.subr.bf16.mxu0 0
  %641 = vmatpush2.bf16.msra.mxu0 %v601
  %642 = vmatprep.subr.bf16.mxu0 0
  %643 = vmatpush2.bf16.msra.mxu0 %v600
  %644 = vmatprep.subr.bf16.mxu0 0
  %645 = vmatpush2.bf16.msra.mxu0 %v599
  %646 = vmatprep.subr.bf16.mxu0 0
  %647 = vmatpush2.bf16.msra.mxu0 %v598
  %648 = vmatprep.subr.bf16.mxu0 0
  %649 = vmatpush2.bf16.msra.mxu0 %v597
  %650 = vmatprep.subr.bf16.mxu0 0
  %651 = vmatpush2.bf16.msra.mxu0 %v596
  %652 = vmatprep.mubr.bf16.mxu0 %v365
  %653 = vmatmul.mubr.bf16.gmra.mxu0 %v364
  %v654 = vpop.f32.mrf.mxu0
  %v655 = vadd.f32 0.0, %v654
  %v656 = vpop.f32.mrf.mxu0
  %v657 = vpop.f32.mrf.mxu0
  %v658 = vadd.f32 0.0, %v657
  %v659 = vpop.f32.mrf.mxu0
  %660 = vmatprep.mubr.bf16.mxu0 %v367
  %661 = vmatmul.mubr.bf16.gmra.mxu0 %v366
  %v662 = vpop.f32.mrf.mxu0
  %v663 = vadd.f32 0.0, %v662
  %v664 = vpop.f32.mrf.mxu0
  %v665 = vpop.f32.mrf.mxu0
  %v666 = vadd.f32 0.0, %v665
  %v667 = vpop.f32.mrf.mxu0
  %668 = vmatprep.mubr.bf16.mxu0 %v369
  %669 = vmatmul.mubr.bf16.gmra.mxu0 %v368
  %v670 = vpop.f32.mrf.mxu0
  %v671 = vadd.f32 0.0, %v670
  %v672 = vpop.f32.mrf.mxu0
  %v673 = vpop.f32.mrf.mxu0
  %v674 = vadd.f32 0.0, %v673
  %v675 = vpop.f32.mrf.mxu0
  %676 = vmatprep.mubr.bf16.mxu0 %v371
  %677 = vmatmul.mubr.bf16.gmra.mxu0 %v370
  %v678 = vpop.f32.mrf.mxu0
  %v679 = vadd.f32 0.0, %v678
  %v680 = vpop.f32.mrf.mxu0
  %v681 = vpop.f32.mrf.mxu0
  %v682 = vadd.f32 0.0, %v681
  %v683 = vpop.f32.mrf.mxu0
  %684 = vmatprep.mubr.bf16.mxu0 %v373
  %685 = vmatmul.mubr.bf16.gmra.mxu0 %v372
  %v686 = vpop.f32.mrf.mxu0
  %v687 = vadd.f32 0.0, %v686
  %v688 = vpop.f32.mrf.mxu0
  %v689 = vpop.f32.mrf.mxu0
  %v690 = vadd.f32 0.0, %v689
  %v691 = vpop.f32.mrf.mxu0
  %692 = vmatprep.mubr.bf16.mxu0 %v375
  %693 = vmatmul.mubr.bf16.gmra.mxu0 %v374
  %v694 = vpop.f32.mrf.mxu0
  %v695 = vadd.f32 0.0, %v694
  %v696 = vpop.f32.mrf.mxu0
  %v697 = vpop.f32.mrf.mxu0
  %v698 = vadd.f32 0.0, %v697
  %v699 = vpop.f32.mrf.mxu0
  %700 = vmatprep.mubr.bf16.mxu0 %v377
  %701 = vmatmul.mubr.bf16.gmra.mxu0 %v376
  %v702 = vpop.f32.mrf.mxu0
  %v703 = vadd.f32 0.0, %v702
  %v704 = vpop.f32.mrf.mxu0
  %v705 = vpop.f32.mrf.mxu0
  %v706 = vadd.f32 0.0, %v705
  %v707 = vpop.f32.mrf.mxu0
  %708 = vmatprep.mubr.bf16.mxu0 %v379
  %709 = vmatmul.mubr.bf16.gmra.mxu0 %v378
  %v710 = vpop.f32.mrf.mxu0
  %v711 = vadd.f32 0.0, %v710
  %v712 = vpop.f32.mrf.mxu0
  %v713 = vpop.f32.mrf.mxu0
  %v714 = vadd.f32 0.0, %v713
  %v715 = vpop.f32.mrf.mxu0
  %716 = vmatprep.mubr.bf16.mxu0 %v381
  %717 = vmatmul.mubr.bf16.gmra.mxu0 %v380
  %v718 = vpop.f32.mrf.mxu0
  %v719 = vadd.f32 0.0, %v718
  %v720 = vpop.f32.mrf.mxu0
  %v721 = vpop.f32.mrf.mxu0
  %v722 = vadd.f32 0.0, %v721
  %v723 = vpop.f32.mrf.mxu0
  %724 = vmatprep.mubr.bf16.mxu0 %v383
  %725 = vmatmul.mubr.bf16.gmra.mxu0 %v382
  %v726 = vpop.f32.mrf.mxu0
  %v727 = vadd.f32 0.0, %v726
  %v728 = vpop.f32.mrf.mxu0
  %v729 = vpop.f32.mrf.mxu0
  %v730 = vadd.f32 0.0, %v729
  %v731 = vpop.f32.mrf.mxu0
  %732 = vmatprep.mubr.bf16.mxu0 %v385
  %733 = vmatmul.mubr.bf16.gmra.mxu0 %v384
  %v734 = vpop.f32.mrf.mxu0
  %v735 = vadd.f32 0.0, %v734
  %v736 = vpop.f32.mrf.mxu0
  %v737 = vpop.f32.mrf.mxu0
  %v738 = vadd.f32 0.0, %v737
  %v739 = vpop.f32.mrf.mxu0
  %740 = vmatprep.mubr.bf16.mxu0 %v387
  %741 = vmatmul.mubr.bf16.gmra.mxu0 %v386
  %v742 = vpop.f32.mrf.mxu0
  %v743 = vadd.f32 0.0, %v742
  %v744 = vpop.f32.mrf.mxu0
  %v745 = vpop.f32.mrf.mxu0
  %v746 = vadd.f32 0.0, %v745
  %v747 = vpop.f32.mrf.mxu0
  %748 = vmatprep.mubr.bf16.mxu0 %v389
  %749 = vmatmul.mubr.bf16.gmra.mxu0 %v388
  %v750 = vpop.f32.mrf.mxu0
  %v751 = vadd.f32 0.0, %v750
  %v752 = vpop.f32.mrf.mxu0
  %v753 = vpop.f32.mrf.mxu0
  %v754 = vadd.f32 0.0, %v753
  %v755 = vpop.f32.mrf.mxu0
  %756 = vmatprep.mubr.bf16.mxu0 %v391
  %757 = vmatmul.mubr.bf16.gmra.mxu0 %v390
  %v758 = vpop.f32.mrf.mxu0
  %v759 = vadd.f32 0.0, %v758
  %v760 = vpop.f32.mrf.mxu0
  %v761 = vpop.f32.mrf.mxu0
  %v762 = vadd.f32 0.0, %v761
  %v763 = vpop.f32.mrf.mxu0
  %764 = vmatprep.mubr.bf16.mxu0 %v393
  %765 = vmatmul.mubr.bf16.gmra.mxu0 %v392
  %v766 = vpop.f32.mrf.mxu0
  %v767 = vadd.f32 0.0, %v766
  %v768 = vpop.f32.mrf.mxu0
  %v769 = vpop.f32.mrf.mxu0
  %v770 = vadd.f32 0.0, %v769
  %v771 = vpop.f32.mrf.mxu0
  %772 = vmatprep.mubr.bf16.mxu0 %v395
  %773 = vmatmul.mubr.bf16.gmra.mxu0 %v394
  %v774 = vpop.f32.mrf.mxu0
  %v775 = vadd.f32 0.0, %v774
  %v776 = vpop.f32.mrf.mxu0
  %v777 = vpop.f32.mrf.mxu0
  %v778 = vadd.f32 0.0, %v777
  %v779 = vpop.f32.mrf.mxu0
  %780 = vmatprep.mubr.bf16.mxu0 %v397
  %781 = vmatmul.mubr.bf16.gmra.mxu0 %v396
  %v782 = vpop.f32.mrf.mxu0
  %v783 = vadd.f32 0.0, %v782
  %v784 = vpop.f32.mrf.mxu0
  %v785 = vpop.f32.mrf.mxu0
  %v786 = vadd.f32 0.0, %v785
  %v787 = vpop.f32.mrf.mxu0
  %788 = vmatprep.mubr.bf16.mxu0 %v399
  %789 = vmatmul.mubr.bf16.gmra.mxu0 %v398
  %v790 = vpop.f32.mrf.mxu0
  %v791 = vadd.f32 0.0, %v790
  %v792 = vpop.f32.mrf.mxu0
  %v793 = vpop.f32.mrf.mxu0
  %v794 = vadd.f32 0.0, %v793
  %v795 = vpop.f32.mrf.mxu0
  %796 = vmatprep.mubr.bf16.mxu0 %v401
  %797 = vmatmul.mubr.bf16.gmra.mxu0 %v400
  %v798 = vpop.f32.mrf.mxu0
  %v799 = vadd.f32 0.0, %v798
  %v800 = vpop.f32.mrf.mxu0
  %v801 = vpop.f32.mrf.mxu0
  %v802 = vadd.f32 0.0, %v801
  %v803 = vpop.f32.mrf.mxu0
  %804 = vmatprep.mubr.bf16.mxu0 %v403
  %805 = vmatmul.mubr.bf16.gmra.mxu0 %v402
  %v806 = vpop.f32.mrf.mxu0
  %v807 = vadd.f32 0.0, %v806
  %v808 = vpop.f32.mrf.mxu0
  %v809 = vpop.f32.mrf.mxu0
  %v810 = vadd.f32 0.0, %v809
  %v811 = vpop.f32.mrf.mxu0
  %812 = vmatprep.mubr.bf16.mxu0 %v405
  %813 = vmatmul.mubr.bf16.gmra.mxu0 %v404
  %v814 = vpop.f32.mrf.mxu0
  %v815 = vadd.f32 0.0, %v814
  %v816 = vpop.f32.mrf.mxu0
  %v817 = vpop.f32.mrf.mxu0
  %v818 = vadd.f32 0.0, %v817
  %v819 = vpop.f32.mrf.mxu0
  %820 = vmatprep.mubr.bf16.mxu0 %v407
  %821 = vmatmul.mubr.bf16.gmra.mxu0 %v406
  %v822 = vpop.f32.mrf.mxu0
  %v823 = vadd.f32 0.0, %v822
  %v824 = vpop.f32.mrf.mxu0
  %v825 = vpop.f32.mrf.mxu0
  %v826 = vadd.f32 0.0, %v825
  %v827 = vpop.f32.mrf.mxu0
  %828 = vmatprep.mubr.bf16.mxu0 %v409
  %829 = vmatmul.mubr.bf16.gmra.mxu0 %v408
  %v830 = vpop.f32.mrf.mxu0
  %v831 = vadd.f32 0.0, %v830
  %v832 = vpop.f32.mrf.mxu0
  %v833 = vpop.f32.mrf.mxu0
  %v834 = vadd.f32 0.0, %v833
  %v835 = vpop.f32.mrf.mxu0
  %836 = vmatprep.mubr.bf16.mxu0 %v411
  %837 = vmatmul.mubr.bf16.gmra.mxu0 %v410
  %v838 = vpop.f32.mrf.mxu0
  %v839 = vadd.f32 0.0, %v838
  %v840 = vpop.f32.mrf.mxu0
  %v841 = vpop.f32.mrf.mxu0
  %v842 = vadd.f32 0.0, %v841
  %v843 = vpop.f32.mrf.mxu0
  %844 = vmatprep.mubr.bf16.mxu0 %v413
  %845 = vmatmul.mubr.bf16.gmra.mxu0 %v412
  %v846 = vpop.f32.mrf.mxu0
  %v847 = vadd.f32 0.0, %v846
  %v848 = vpop.f32.mrf.mxu0
  %v849 = vpop.f32.mrf.mxu0
  %v850 = vadd.f32 0.0, %v849
  %v851 = vpop.f32.mrf.mxu0
  %852 = vmatprep.mubr.bf16.mxu0 %v415
  %853 = vmatmul.mubr.bf16.gmra.mxu0 %v414
  %v854 = vpop.f32.mrf.mxu0
  %v855 = vadd.f32 0.0, %v854
  %v856 = vpop.f32.mrf.mxu0
  %v857 = vpop.f32.mrf.mxu0
  %v858 = vadd.f32 0.0, %v857
  %v859 = vpop.f32.mrf.mxu0
  %860 = vmatprep.mubr.bf16.mxu0 %v417
  %861 = vmatmul.mubr.bf16.gmra.mxu0 %v416
  %v862 = vpop.f32.mrf.mxu0
  %v863 = vadd.f32 0.0, %v862
  %v864 = vpop.f32.mrf.mxu0
  %v865 = vpop.f32.mrf.mxu0
  %v866 = vadd.f32 0.0, %v865
  %v867 = vpop.f32.mrf.mxu0
  %868 = vmatprep.mubr.bf16.mxu0 %v419
  %869 = vmatmul.mubr.bf16.gmra.mxu0 %v418
  %v870 = vpop.f32.mrf.mxu0
  %v871 = vadd.f32 0.0, %v870
  %v872 = vpop.f32.mrf.mxu0
  %v873 = vpop.f32.mrf.mxu0
  %v874 = vadd.f32 0.0, %v873
  %v875 = vpop.f32.mrf.mxu0
  %876 = vmatprep.mubr.bf16.mxu0 %v421
  %877 = vmatmul.mubr.bf16.gmra.mxu0 %v420
  %v878 = vpop.f32.mrf.mxu0
  %v879 = vadd.f32 0.0, %v878
  %v880 = vpop.f32.mrf.mxu0
  %v881 = vpop.f32.mrf.mxu0
  %v882 = vadd.f32 0.0, %v881
  %v883 = vpop.f32.mrf.mxu0
  %884 = vmatprep.mubr.bf16.mxu0 %v423
  %885 = vmatmul.mubr.bf16.gmra.mxu0 %v422
  %v886 = vpop.f32.mrf.mxu0
  %v887 = vadd.f32 0.0, %v886
  %v888 = vpop.f32.mrf.mxu0
  %v889 = vpop.f32.mrf.mxu0
  %v890 = vadd.f32 0.0, %v889
  %v891 = vpop.f32.mrf.mxu0
  %892 = vmatprep.mubr.bf16.mxu0 %v425
  %893 = vmatmul.mubr.bf16.gmra.mxu0 %v424
  %v894 = vpop.f32.mrf.mxu0
  %v895 = vadd.f32 0.0, %v894
  %v896 = vpop.f32.mrf.mxu0
  %v897 = vpop.f32.mrf.mxu0
  %v898 = vadd.f32 0.0, %v897
  %v899 = vpop.f32.mrf.mxu0
  %900 = vmatprep.mubr.bf16.mxu0 %v427
  %901 = vmatmul.mubr.bf16.gmra.mxu0 %v426
  %v902 = vpop.f32.mrf.mxu0
  %v903 = vadd.f32 0.0, %v902
  %v904 = vpop.f32.mrf.mxu0
  %v905 = vpop.f32.mrf.mxu0
  %v906 = vadd.f32 0.0, %v905
  %v907 = vpop.f32.mrf.mxu0
  %908 = vmatprep.mubr.bf16.mxu0 %v429
  %909 = vmatmul.mubr.bf16.gmra.mxu0 %v428
  %v910 = vpop.f32.mrf.mxu0
  %v911 = vadd.f32 0.0, %v910
  %v912 = vpop.f32.mrf.mxu0
  %v913 = vpop.f32.mrf.mxu0
  %v914 = vadd.f32 0.0, %v913
  %v915 = vpop.f32.mrf.mxu0
  %916 = vmatprep.mubr.bf16.mxu0 %v431
  %917 = vmatmul.mubr.bf16.gmra.mxu0 %v430
  %v918 = vpop.f32.mrf.mxu0
  %v919 = vadd.f32 0.0, %v918
  %v920 = vpop.f32.mrf.mxu0
  %v921 = vpop.f32.mrf.mxu0
  %v922 = vadd.f32 0.0, %v921
  %v923 = vpop.f32.mrf.mxu0
  %924 = vmatprep.mubr.bf16.mxu0 %v433
  %925 = vmatmul.mubr.bf16.gmra.mxu0 %v432
  %v926 = vpop.f32.mrf.mxu0
  %v927 = vadd.f32 0.0, %v926
  %v928 = vpop.f32.mrf.mxu0
  %v929 = vpop.f32.mrf.mxu0
  %v930 = vadd.f32 0.0, %v929
  %v931 = vpop.f32.mrf.mxu0
  %932 = vmatprep.mubr.bf16.mxu0 %v435
  %933 = vmatmul.mubr.bf16.gmra.mxu0 %v434
  %v934 = vpop.f32.mrf.mxu0
  %v935 = vadd.f32 0.0, %v934
  %v936 = vpop.f32.mrf.mxu0
  %v937 = vpop.f32.mrf.mxu0
  %v938 = vadd.f32 0.0, %v937
  %v939 = vpop.f32.mrf.mxu0
  %940 = vmatprep.mubr.bf16.mxu0 %v437
  %941 = vmatmul.mubr.bf16.gmra.mxu0 %v436
  %v942 = vpop.f32.mrf.mxu0
  %v943 = vadd.f32 0.0, %v942
  %v944 = vpop.f32.mrf.mxu0
  %v945 = vpop.f32.mrf.mxu0
  %v946 = vadd.f32 0.0, %v945
  %v947 = vpop.f32.mrf.mxu0
  %948 = vmatprep.mubr.bf16.mxu0 %v439
  %949 = vmatmul.mubr.bf16.gmra.mxu0 %v438
  %v950 = vpop.f32.mrf.mxu0
  %v951 = vadd.f32 0.0, %v950
  %v952 = vpop.f32.mrf.mxu0
  %v953 = vpop.f32.mrf.mxu0
  %v954 = vadd.f32 0.0, %v953
  %v955 = vpop.f32.mrf.mxu0
  %956 = vmatprep.mubr.bf16.mxu0 %v441
  %957 = vmatmul.mubr.bf16.gmra.mxu0 %v440
  %v958 = vpop.f32.mrf.mxu0
  %v959 = vadd.f32 0.0, %v958
  %v960 = vpop.f32.mrf.mxu0
  %v961 = vpop.f32.mrf.mxu0
  %v962 = vadd.f32 0.0, %v961
  %v963 = vpop.f32.mrf.mxu0
  %964 = vmatprep.mubr.bf16.mxu0 %v443
  %965 = vmatmul.mubr.bf16.gmra.mxu0 %v442
  %v966 = vpop.f32.mrf.mxu0
  %v967 = vadd.f32 0.0, %v966
  %v968 = vpop.f32.mrf.mxu0
  %v969 = vpop.f32.mrf.mxu0
  %v970 = vadd.f32 0.0, %v969
  %v971 = vpop.f32.mrf.mxu0
  %972 = vdwg.mxu0
  %973 = vst [vmem:[%s2] sm:$0xff] %v655
  %974 = vst [vmem:[%s2 + $0x8] sm:$0xff] %v658
  %975 = vst [vmem:[%s2 + $0x10] sm:$0xff] %v663
  %976 = vst [vmem:[%s2 + $0x18] sm:$0xff] %v666
  %977 = vst [vmem:[%s2 + $0x20] sm:$0xff] %v671
  %978 = vst [vmem:[%s2 + $0x28] sm:$0xff] %v674
  %979 = vst [vmem:[%s2 + $0x30] sm:$0xff] %v679
  %980 = vst [vmem:[%s2 + $0x38] sm:$0xff] %v682
  %981 = vst [vmem:[%s2 + $0x40] sm:$0xff] %v687
  %982 = vst [vmem:[%s2 + $0x48] sm:$0xff] %v690
  %983 = vst [vmem:[%s2 + $0x50] sm:$0xff] %v695
  %984 = vst [vmem:[%s2 + $0x58] sm:$0xff] %v698
  %985 = vst [vmem:[%s2 + $0x60] sm:$0xff] %v703
  %986 = vst [vmem:[%s2 + $0x68] sm:$0xff] %v706
  %987 = vst [vmem:[%s2 + $0x70] sm:$0xff] %v711
  %988 = vst [vmem:[%s2 + $0x78] sm:$0xff] %v714
  %989 = vst [vmem:[%s2 + $0x80] sm:$0xff] %v719
  %990 = vst [vmem:[%s2 + $0x88] sm:$0xff] %v722
  %991 = vst [vmem:[%s2 + $0x90] sm:$0xff] %v727
  %992 = vst [vmem:[%s2 + $0x98] sm:$0xff] %v730
  %993 = vst [vmem:[%s2 + $0xa0] sm:$0xff] %v735
  %994 = vst [vmem:[%s2 + $0xa8] sm:$0xff] %v738
  %995 = vst [vmem:[%s2 + $0xb0] sm:$0xff] %v743
  %996 = vst [vmem:[%s2 + $0xb8] sm:$0xff] %v746
  %997 = vst [vmem:[%s2 + $0xc0] sm:$0xff] %v751
  %998 = vst [vmem:[%s2 + $0xc8] sm:$0xff] %v754
  %999 = vst [vmem:[%s2 + $0xd0] sm:$0xff] %v759
  %1000 = vst [vmem:[%s2 + $0xd8] sm:$0xff] %v762
  %1001 = vst [vmem:[%s2 + $0xe0] sm:$0xff] %v767
  %1002 = vst [vmem:[%s2 + $0xe8] sm:$0xff] %v770
  %1003 = vst [vmem:[%s2 + $0xf0] sm:$0xff] %v775
  %1004 = vst [vmem:[%s2 + $0xf8] sm:$0xff] %v778
  %1005 = vst [vmem:[%s2 + $0x100] sm:$0xff] %v783
  %1006 = vst [vmem:[%s2 + $0x108] sm:$0xff] %v786
  %1007 = vst [vmem:[%s2 + $0x110] sm:$0xff] %v791
  %1008 = vst [vmem:[%s2 + $0x118] sm:$0xff] %v794
  %1009 = vst [vmem:[%s2 + $0x120] sm:$0xff] %v799
  %1010 = vst [vmem:[%s2 + $0x128] sm:$0xff] %v802
  %1011 = vst [vmem:[%s2 + $0x130] sm:$0xff] %v807
  %1012 = vst [vmem:[%s2 + $0x138] sm:$0xff] %v810
  %1013 = vst [vmem:[%s2 + $0x140] sm:$0xff] %v815
  %1014 = vst [vmem:[%s2 + $0x148] sm:$0xff] %v818
  %1015 = vst [vmem:[%s2 + $0x150] sm:$0xff] %v823
  %1016 = vst [vmem:[%s2 + $0x158] sm:$0xff] %v826
  %1017 = vst [vmem:[%s2 + $0x160] sm:$0xff] %v831
  %1018 = vst [vmem:[%s2 + $0x168] sm:$0xff] %v834
  %1019 = vst [vmem:[%s2 + $0x170] sm:$0xff] %v839
  %1020 = vst [vmem:[%s2 + $0x178] sm:$0xff] %v842
  %1021 = vst [vmem:[%s2 + $0x180] sm:$0xff] %v847
  %1022 = vst [vmem:[%s2 + $0x188] sm:$0xff] %v850
  %1023 = vst [vmem:[%s2 + $0x190] sm:$0xff] %v855
  %1024 = vst [vmem:[%s2 + $0x198] sm:$0xff] %v858
  %1025 = vst [vmem:[%s2 + $0x1a0] sm:$0xff] %v863
  %1026 = vst [vmem:[%s2 + $0x1a8] sm:$0xff] %v866
  %1027 = vst [vmem:[%s2 + $0x1b0] sm:$0xff] %v871
  %1028 = vst [vmem:[%s2 + $0x1b8] sm:$0xff] %v874
  %1029 = vst [vmem:[%s2 + $0x1c0] sm:$0xff] %v879
  %1030 = vst [vmem:[%s2 + $0x1c8] sm:$0xff] %v882
  %1031 = vst [vmem:[%s2 + $0x1d0] sm:$0xff] %v887
  %1032 = vst [vmem:[%s2 + $0x1d8] sm:$0xff] %v890
  %1033 = vst [vmem:[%s2 + $0x1e0] sm:$0xff] %v895
  %1034 = vst [vmem:[%s2 + $0x1e8] sm:$0xff] %v898
  %1035 = vst [vmem:[%s2 + $0x1f0] sm:$0xff] %v903
  %1036 = vst [vmem:[%s2 + $0x1f8] sm:$0xff] %v906
  %1037 = vst [vmem:[%s2 + $0x200] sm:$0xff] %v911
  %1038 = vst [vmem:[%s2 + $0x208] sm:$0xff] %v914
  %1039 = vst [vmem:[%s2 + $0x210] sm:$0xff] %v919
  %1040 = vst [vmem:[%s2 + $0x218] sm:$0xff] %v922
  %1041 = vst [vmem:[%s2 + $0x220] sm:$0xff] %v927
  %1042 = vst [vmem:[%s2 + $0x228] sm:$0xff] %v930
  %1043 = vst [vmem:[%s2 + $0x230] sm:$0xff] %v935
  %1044 = vst [vmem:[%s2 + $0x238] sm:$0xff] %v938
  %1045 = vst [vmem:[%s2 + $0x240] sm:$0xff] %v943
  %1046 = vst [vmem:[%s2 + $0x248] sm:$0xff] %v946
  %1047 = vst [vmem:[%s2 + $0x250] sm:$0xff] %v951
  %1048 = vst [vmem:[%s2 + $0x258] sm:$0xff] %v954
  %1049 = vst [vmem:[%s2 + $0x260] sm:$0xff] %v959
  %1050 = vst [vmem:[%s2 + $0x268] sm:$0xff] %v962
  %1051 = vst [vmem:[%s2 + $0x270] sm:$0xff] %v967
  %1052 = vst [vmem:[%s2 + $0x278] sm:$0xff] %v970
  // Predicated region
  $region10: #{fwd.1} parent=0 // pred_check
    _
  $region11: #{fwd.1} parent=0 // pred_check_branch
    %1054 = sbr.rel (0) target = $region13
  $region12: #{fwd.1} parent=0 // pred_region
    _
  $region13: #{fwd.1} parent=0 // pred_fallthru
    _
  // Predicated region
  $region14: #{fwd.1} parent=0 // pred_check
    _
  $region15: #{fwd.1} parent=0 // pred_check_branch
    %1056 = sbr.rel (0) target = $region17
  $region16: #{fwd.1} parent=0 // pred_region
    _
  $region17: #{fwd.1} parent=0 // pred_fallthru
    _

</llo_original>
